<compile_context>
chip_gen: v5e
topology: v5e:2x2
jax: 0.10.0
libtpu: 0.0.40
codegen_flags: <defaults>
</compile_context>

<pallas_src>
import jax
import jax.numpy as jnp
from jax.experimental import pallas as pl
from jax.experimental.pallas import tpu as pltpu


def _round_up(n, m):
    return ((n + m - 1) // m) * m


def _leaky_relu(x, slope=0.2):
    return jnp.where(x > 0, x, slope * x)


def _vmem_capacity_bytes():
    """Per-core VMEM capacity. Falls back to 64 MiB (v7x, the smallest) so the
    tiling plan stays conservative on every generation if the query fails."""
    try:
        return int(pltpu.get_tpu_info().vmem_capacity_bytes)
    except Exception:
        return 64 * 1024 * 1024


# ---------------------------------------------------------------------------
# Kernel
# ---------------------------------------------------------------------------
def discriminator_kernel(x_ref, w1_ref, b1_ref, w2_ref, b2_ref, w3_ref, b3_ref,
                         o_ref):
    # x block: (TB, D) bf16, pre-cast on the host (dominant HBM stream halved;
    # no in-kernel cast, no feature padding).
    x = x_ref[...]

    # Layer 1: Linear(D -> Hp) + LeakyReLU(0.2). bf16 MXU, f32 accumulate,
    # f32 bias add / elementwise.
    h = jnp.dot(x, w1_ref[...], preferred_element_type=jnp.float32) + b1_ref[...]
    h = _leaky_relu(h)

    # Layer 2: Linear(Hp -> Hp) + LeakyReLU(0.2).
    h = jnp.dot(h.astype(jnp.bfloat16), w2_ref[...],
                preferred_element_type=jnp.float32) + b2_ref[...]
    h = _leaky_relu(h)

    # Layer 3: Linear(Hp -> 1), computed transposed so the result is lane-dense:
    # w3_ref is (8, Hp) (the single output row replicated over 8 sublanes);
    # contracting the hidden axis against h (TB, Hp) gives (8, TB) with the
    # batch running along the 128-lane axis -> unmasked full-width stores.
    out = jnp.einsum("oh,th->ot", w3_ref[...], h.astype(jnp.bfloat16),
                     preferred_element_type=jnp.float32)
    out = out + b3_ref[0]                       # scalar bias from SMEM
    o_ref[...] = out.astype(o_ref.dtype)        # bf16 slab halves writeback


# ---------------------------------------------------------------------------
# One-time parameter preparation (hoisted out of the per-call forward; WGAN-GP
# calls the discriminator 3+ times per optimizer step).
# ---------------------------------------------------------------------------
def prepare_discriminator_params(params, *, hidden_multiple=128):
    """Pad hidden dim to a multiple of `hidden_multiple` (use 256 on v6e/v7x if
    H lands just over a 256 multiple), pre-cast weights to bf16, build the
    8-sublane replicated w3 slab, keep biases f32.  Padded cols/rows are zero,
    so results are exact."""
    w1, b1 = params["w1"], params["b1"]
    w2, b2 = params["w2"], params["b2"]
    w3, b3 = params["w3"], params["b3"]

    D, H = w1.shape
    Hp = _round_up(H, hidden_multiple)

    w1_p = jnp.pad(w1.astype(jnp.bfloat16), ((0, 0), (0, Hp - H)))
    b1_p = jnp.pad(b1.astype(jnp.float32).reshape(1, H), ((0, 0), (0, Hp - H)))
    w2_p = jnp.pad(w2.astype(jnp.bfloat16), ((0, Hp - H), (0, Hp - H)))
    b2_p = jnp.pad(b2.astype(jnp.float32).reshape(1, H), ((0, 0), (0, Hp - H)))
    w3_row = jnp.pad(w3.astype(jnp.bfloat16).reshape(1, H), ((0, 0), (0, Hp - H)))
    w3_slab = jnp.tile(w3_row, (8, 1))                 # (8, Hp), rows identical
    b3_p = b3.reshape(1).astype(jnp.float32)           # scalar -> SMEM

    return {"w1": w1_p, "b1": b1_p, "w2": w2_p, "b2": b2_p,
            "w3_slab": w3_slab, "b3": b3_p}


# ---------------------------------------------------------------------------
# VMEM-aware tiling plan
# ---------------------------------------------------------------------------
def _plan_tiling(B, D, Hp, block_batch, out_itemsize, cap, weight_buffers):
    TB = min(_round_up(max(block_batch, 128), 128), _round_up(B, 128))

    def weight_bytes(nbuf):
        # bf16 weights + f32 biases, times buffer count.
        return nbuf * ((D * Hp + Hp * Hp + 8 * Hp) * 2 + 2 * Hp * 4)

    if weight_buffers is None:
        # Single-buffer the constant-index weights only when double-buffering
        # them would eat a big slice of VMEM (matters on v7x's 64 MiB/TC with
        # large Hp); small configs keep the default pipeline.
        weight_buffers = 1 if weight_bytes(2) > 0.35 * cap else 2

    def need_bytes(tb):
        x_stream = 2 * tb * D * 2                          # bf16, double-buffered
        out_stream = 2 * 8 * tb * out_itemsize             # (8, TB) slab, x2 bufs
        interm = tb * Hp * (4 + 4 + 2) + 8 * tb * 4        # f32 h (x2, generous) + bf16 copy + f32 slab
        return x_stream + out_stream + interm + weight_bytes(weight_buffers)

    while TB > 128 and need_bytes(TB) > 0.8 * cap:
        TB = max(128, _round_up(TB // 2, 128))

    need = need_bytes(TB)
    vmem_limit = int(min(max(1.5 * need, 16 * 1024 * 1024), 0.9 * cap))
    nb = pl.cdiv(B, TB)
    return TB, nb, weight_buffers, vmem_limit


# ---------------------------------------------------------------------------
# Forward wrapper
# ---------------------------------------------------------------------------
def discriminator_forward(x, params, *, block_batch=1024, weight_buffers=None,
                          batch_dimension_semantics="parallel"):
    """x: (B, input_dim) float32 (or bf16).
    params: output of prepare_discriminator_params (preferred; prepare once per
    optimizer step), or the raw {"w1","b1","w2","b2","w3","b3"} dict.
    On v7x pass batch_dimension_semantics=pltpu.CORE_PARALLEL to guarantee the
    batch grid axis is split across both TensorCores."""
    if "w3_slab" not in params:                 # raw params -> prepare on the fly
        params = prepare_discriminator_params(params)

    w1_p, b1_p = params["w1"], params["b1"]
    w2_p, b2_p = params["w2"], params["b2"]
    w3_slab, b3_p = params["w3_slab"], params["b3"]

    B, D = x.shape
    assert w1_p.shape[0] == D, (w1_p.shape, D)
    Hp = w1_p.shape[1]

    out_dtype = jnp.bfloat16                    # lane-dense slab in bf16
    cap = _vmem_capacity_bytes()
    TB, nb, wbuf, vmem_limit = _plan_tiling(
        B, D, Hp, block_batch, jnp.dtype(out_dtype).itemsize, cap, weight_buffers)
    Bp = nb * TB

    # Pad ONLY the batch dim (padded rows are dropped after the call) and cast
    # to bf16 in the same fused op -> minimal HBM traffic for the x stream.
    x_p = jnp.pad(x.astype(jnp.bfloat16), ((0, Bp - B), (0, 0)))

    # Resident (constant-index) operands: optionally single-buffered.
    wkw = {"pipeline_mode": pl.Buffered(1)} if wbuf == 1 else {}

    out = pl.pallas_call(
        discriminator_kernel,
        out_shape=jax.ShapeDtypeStruct((8, Bp), out_dtype),
        grid=(nb,),
        in_specs=[
            pl.BlockSpec((TB, D), lambda i: (i, 0)),                  # x: streamed, full-extent D
            pl.BlockSpec((D, Hp), lambda i: (0, 0), **wkw),           # w1: resident
            pl.BlockSpec((1, Hp), lambda i: (0, 0), **wkw),           # b1: resident
            pl.BlockSpec((Hp, Hp), lambda i: (0, 0), **wkw),          # w2: resident
            pl.BlockSpec((1, Hp), lambda i: (0, 0), **wkw),           # b2: resident
            pl.BlockSpec((8, Hp), lambda i: (0, 0), **wkw),           # w3 slab: resident
            pl.BlockSpec(memory_space=pltpu.MemorySpace.SMEM),        # b3 scalar
        ],
        out_specs=pl.BlockSpec((8, TB), lambda i: (0, i)),            # lane-dense slab
        compiler_params=pltpu.CompilerParams(
            dimension_semantics=(batch_dimension_semantics,),
            vmem_limit_bytes=vmem_limit,
        ),
    )(x_p, w1_p, b1_p, w2_p, b2_p, w3_slab, b3_p)

    # (8, Bp) slab: all 8 sublane rows are identical; take row 0, drop batch
    # padding, return (B, 1) f32 like the PyTorch module.
    return out[0, :B].astype(jnp.float32)[:, None]


# ---------------------------------------------------------------------------
# Init / references
# ---------------------------------------------------------------------------
def init_params(key, input_dim, hidden_dim):
    """Deterministic init mirroring PyTorch nn.Linear default:
    U(-1/sqrt(fan_in), 1/sqrt(fan_in)) for both weight and bias."""
    def linear(key, fan_in, fan_out):
        kw, kb = jax.random.split(key)
        bound = 1.0 / jnp.sqrt(jnp.float32(fan_in))
        w = jax.random.uniform(kw, (fan_in, fan_out), jnp.float32, -bound, bound)
        b = jax.random.uniform(kb, (1, fan_out), jnp.float32, -bound, bound)
        return w, b

    k1, k2, k3 = jax.random.split(key, 3)
    w1, b1 = linear(k1, input_dim, hidden_dim)
    w2, b2 = linear(k2, hidden_dim, hidden_dim)
    w3, b3 = linear(k3, hidden_dim, 1)
    return {"w1": w1, "b1": b1, "w2": w2, "b2": b2, "w3": w3, "b3": b3}


def reference_forward(x, params):
    """Pure f32 reference (PyTorch-equivalent math)."""
    h = x @ params["w1"] + params["b1"]
    h = jnp.where(h > 0, h, 0.2 * h)
    h = h @ params["w2"] + params["b2"]
    h = jnp.where(h > 0, h, 0.2 * h)
    return h @ params["w3"] + params["b3"]


def reference_forward_bf16(x, params):
    """Reference using the same bf16-matmul / f32-accumulate recipe as the kernel."""
    bf = lambda a: a.astype(jnp.bfloat16)
    h = jnp.dot(bf(x), bf(params["w1"]), preferred_element_type=jnp.float32) + params["b1"]
    h = jnp.where(h > 0, h, 0.2 * h)
    h = jnp.dot(bf(h), bf(params["w2"]), preferred_element_type=jnp.float32) + params["b2"]
    h = jnp.where(h > 0, h, 0.2 * h)
    return jnp.dot(bf(h), bf(params["w3"]), preferred_element_type=jnp.float32) + params["b3"]


if __name__ == "__main__":
    key = jax.random.PRNGKey(0)
    k_x, k_p = jax.random.split(key)

    batch, input_dim, hidden_dim = 8, 16, 32
    x = jax.random.normal(k_x, (batch, input_dim), jnp.float32)
    params = init_params(k_p, input_dim, hidden_dim)

    # Weight prep hoisted out of the forward (done once per optimizer step).
    prepped = prepare_discriminator_params(params)

    fwd = jax.jit(discriminator_forward)
    out = jax.block_until_ready(fwd(x, prepped))
    assert out.shape == (batch, 1), out.shape

    ref_bf16 = reference_forward_bf16(x, params)
    ref_f32 = reference_forward(x, params)
    assert jnp.allclose(out, ref_bf16, atol=1e-2, rtol=1e-2), "mismatch vs bf16 reference"
    assert jnp.allclose(out, ref_f32, atol=5e-2, rtol=5e-2), "mismatch vs f32 reference"

    print("KERNEL_OK")
</pallas_src>

<mosaic_0001>
module attributes {stable_mosaic.version = 11 : i64} {
  func.func @discriminator_kernel(%arg0: i32, %arg1: memref<128x16xbf16, #tpu.memory_space<vmem>>, %arg2: memref<16x128xbf16, #tpu.memory_space<vmem>>, %arg3: memref<1x128xf32, #tpu.memory_space<vmem>>, %arg4: memref<128x128xbf16, #tpu.memory_space<vmem>>, %arg5: memref<1x128xf32, #tpu.memory_space<vmem>>, %arg6: memref<8x128xbf16, #tpu.memory_space<vmem>>, %arg7: memref<1xf32, #tpu.memory_space<smem>>, %arg8: memref<8x128xbf16, #tpu.memory_space<vmem>>) attributes {dimension_semantics = [#tpu.dimension_semantics<parallel>], iteration_bounds = array<i64: 1>, scalar_prefetch = 0 : i64, scratch_operands = 0 : i64, tpu.core_type = #tpu.core_type<tc>, window_params = [{transform_indices = @transform_0, window_bounds = array<i64: 128, 16>}, {pipeline_mode = #tpu.pipeline_mode<synchronous>, transform_indices = @transform_1, window_bounds = array<i64: 16, 128>}, {pipeline_mode = #tpu.pipeline_mode<synchronous>, transform_indices = @transform_2, window_bounds = array<i64: 1, 128>}, {pipeline_mode = #tpu.pipeline_mode<synchronous>, transform_indices = @transform_3, window_bounds = array<i64: 128, 128>}, {pipeline_mode = #tpu.pipeline_mode<synchronous>, transform_indices = @transform_4, window_bounds = array<i64: 1, 128>}, {pipeline_mode = #tpu.pipeline_mode<synchronous>, transform_indices = @transform_5, window_bounds = array<i64: 8, 128>}, {transform_indices = @transform_6, window_bounds = array<i64: 1>}, {transform_indices = @transform_7, window_bounds = array<i64: 8, 128>}]} {
    %c0 = arith.constant 0 : index
    %c0_0 = arith.constant 0 : index
    %0 = vector.load %arg1[%c0, %c0_0] : memref<128x16xbf16, #tpu.memory_space<vmem>>, vector<128x16xbf16>
    %c0_1 = arith.constant 0 : index
    %c0_2 = arith.constant 0 : index
    %1 = vector.load %arg2[%c0_1, %c0_2] : memref<16x128xbf16, #tpu.memory_space<vmem>>, vector<16x128xbf16>
    %cst = arith.constant dense<0.000000e+00> : vector<128x128xf32>
    %2 = tpu.matmul %0, %1, %cst {dimension_numbers = #tpu.dot_dimension_numbers<[1], [0], [0], [1], [0, 0, 1, 1], [], []>} : vector<128x16xbf16>, vector<16x128xbf16>, vector<128x128xf32> -> vector<128x128xf32>
    %c0_3 = arith.constant 0 : index
    %c0_4 = arith.constant 0 : index
    %3 = vector.load %arg3[%c0_3, %c0_4] : memref<1x128xf32, #tpu.memory_space<vmem>>, vector<1x128xf32>
    %4 = vector.broadcast %3 : vector<1x128xf32> to vector<128x128xf32>
    %5 = arith.addf %2, %4 : vector<128x128xf32>
    %cst_5 = arith.constant 0.000000e+00 : f32
    %6 = vector.broadcast %cst_5 : f32 to vector<128x128xf32>
    %7 = arith.cmpf ogt, %5, %6 : vector<128x128xf32>
    %cst_6 = arith.constant 2.000000e-01 : f32
    %8 = vector.broadcast %cst_6 : f32 to vector<128x128xf32>
    %9 = arith.mulf %8, %5 : vector<128x128xf32>
    %10 = arith.select %7, %5, %9 : vector<128x128xi1>, vector<128x128xf32>
    %11 = arith.truncf %10 : vector<128x128xf32> to vector<128x128xbf16>
    %c0_7 = arith.constant 0 : index
    %c0_8 = arith.constant 0 : index
    %12 = vector.load %arg4[%c0_7, %c0_8] : memref<128x128xbf16, #tpu.memory_space<vmem>>, vector<128x128xbf16>
    %cst_9 = arith.constant dense<0.000000e+00> : vector<128x128xf32>
    %13 = tpu.matmul %11, %12, %cst_9 {dimension_numbers = #tpu.dot_dimension_numbers<[1], [0], [0], [1], [0, 0, 1, 1], [], []>} : vector<128x128xbf16>, vector<128x128xbf16>, vector<128x128xf32> -> vector<128x128xf32>
    %c0_10 = arith.constant 0 : index
    %c0_11 = arith.constant 0 : index
    %14 = vector.load %arg5[%c0_10, %c0_11] : memref<1x128xf32, #tpu.memory_space<vmem>>, vector<1x128xf32>
    %15 = vector.broadcast %14 : vector<1x128xf32> to vector<128x128xf32>
    %16 = arith.addf %13, %15 : vector<128x128xf32>
    %cst_12 = arith.constant 0.000000e+00 : f32
    %17 = vector.broadcast %cst_12 : f32 to vector<128x128xf32>
    %18 = arith.cmpf ogt, %16, %17 : vector<128x128xf32>
    %cst_13 = arith.constant 2.000000e-01 : f32
    %19 = vector.broadcast %cst_13 : f32 to vector<128x128xf32>
    %20 = arith.mulf %19, %16 : vector<128x128xf32>
    %21 = arith.select %18, %16, %20 : vector<128x128xi1>, vector<128x128xf32>
    %c0_14 = arith.constant 0 : index
    %c0_15 = arith.constant 0 : index
    %22 = vector.load %arg6[%c0_14, %c0_15] : memref<8x128xbf16, #tpu.memory_space<vmem>>, vector<8x128xbf16>
    %23 = arith.truncf %21 : vector<128x128xf32> to vector<128x128xbf16>
    "tpu.trace_start"() <{level = 10 : i32, message = "oh,th->ot"}> : () -> ()
    %cst_16 = arith.constant dense<0.000000e+00> : vector<8x128xf32>
    %24 = tpu.matmul %22, %23, %cst_16 {dimension_numbers = #tpu.dot_dimension_numbers<[1], [1], [0], [0], [0, 0, 1, 0], [], []>} : vector<8x128xbf16>, vector<128x128xbf16>, vector<8x128xf32> -> vector<8x128xf32>
    "tpu.trace_stop"() : () -> ()
    %c0_17 = arith.constant 0 : index
    %25 = memref.load %arg7[%c0_17] : memref<1xf32, #tpu.memory_space<smem>>
    %26 = vector.broadcast %25 : f32 to vector<8x128xf32>
    %27 = arith.addf %24, %26 : vector<8x128xf32>
    %28 = arith.truncf %27 : vector<8x128xf32> to vector<8x128xbf16>
    %c0_18 = arith.constant 0 : index
    %c0_19 = arith.constant 0 : index
    %29 = vector.load %arg8[%c0_18, %c0_19] : memref<8x128xbf16, #tpu.memory_space<vmem>>, vector<8x128xbf16>
    tpu.vector_store %arg8[%c0_18, %c0_19], %28 {strides = array<i32>} : memref<8x128xbf16, #tpu.memory_space<vmem>>, vector<8x128xbf16>,
    return
  }
  func.func @transform_0(%arg0: i32) -> (i32, i32) {
    %c0_i32 = arith.constant 0 : i32
    %c0_i32_0 = arith.constant 0 : i32
    return %arg0, %c0_i32 : i32, i32
  }
  func.func @transform_1(%arg0: i32) -> (i32, i32) {
    %c0_i32 = arith.constant 0 : i32
    %c0_i32_0 = arith.constant 0 : i32
    %c0_i32_1 = arith.constant 0 : i32
    return %c0_i32, %c0_i32_0 : i32, i32
  }
  func.func @transform_2(%arg0: i32) -> (i32, i32) {
    %c0_i32 = arith.constant 0 : i32
    %c0_i32_0 = arith.constant 0 : i32
    %c0_i32_1 = arith.constant 0 : i32
    return %c0_i32, %c0_i32_0 : i32, i32
  }
  func.func @transform_3(%arg0: i32) -> (i32, i32) {
    %c0_i32 = arith.constant 0 : i32
    %c0_i32_0 = arith.constant 0 : i32
    %c0_i32_1 = arith.constant 0 : i32
    return %c0_i32, %c0_i32_0 : i32, i32
  }
  func.func @transform_4(%arg0: i32) -> (i32, i32) {
    %c0_i32 = arith.constant 0 : i32
    %c0_i32_0 = arith.constant 0 : i32
    %c0_i32_1 = arith.constant 0 : i32
    return %c0_i32, %c0_i32_0 : i32, i32
  }
  func.func @transform_5(%arg0: i32) -> (i32, i32) {
    %c0_i32 = arith.constant 0 : i32
    %c0_i32_0 = arith.constant 0 : i32
    %c0_i32_1 = arith.constant 0 : i32
    return %c0_i32, %c0_i32_0 : i32, i32
  }
  func.func @transform_6(%arg0: i32) -> i32 {
    %c0_i32 = arith.constant 0 : i32
    %c0_i32_0 = arith.constant 0 : i32
    return %c0_i32 : i32
  }
  func.func @transform_7(%arg0: i32) -> (i32, i32) {
    %c0_i32 = arith.constant 0 : i32
    %c0_i32_0 = arith.constant 0 : i32
    return %c0_i32, %arg0 : i32, i32
  }
}

</mosaic_0001>

<llo_original>
// kernel: discriminator_forward.1
$region0: #{discriminator_forward.1}
  #allocation0 [shape = 'u32[]', space=smem, size = 0x4, offset = 0x4, fixed_abs, tag = 'smem constant byte address 0x4 - core index']
  #allocation1 [shape = 'u32[72,128]{1,0:T(1,128)}', space=vmem, size = 0x9000, scoped, tag = 'internal scratch']
  #allocation2 [shape = 'f32[1]{0:T(128)S(6)}', space=smem, size = 0x200, scoped, tag = 'scoped memory for discriminator_forward.1']
  %s0 = inlined_call_operand.vmem [shape: bf16[128,16], index: 0, kind: input, shape index: {}]
  %s1 = inlined_call_operand.vmem [shape: bf16[16,128], index: 1, kind: input, shape index: {}]
  %s2 = inlined_call_operand.vmem [shape: f32[1,128], index: 2, kind: input, shape index: {}]
  %s3 = inlined_call_operand.vmem [shape: bf16[128,128], index: 3, kind: input, shape index: {}]
  %s4 = inlined_call_operand.vmem [shape: f32[1,128], index: 4, kind: input, shape index: {}]
  %s5 = inlined_call_operand.vmem [shape: bf16[8,128], index: 5, kind: input, shape index: {}]
  %s6 = inlined_call_operand.<no memory space> [shape: f32[1], index: 6, kind: input, shape index: {}]
  %s7 = inlined_call_operand.vmem [shape: bf16[8,128], index: 7, kind: output, shape index: {}]
  %s8 = sld [smem:[#allocation0]]
  $region38: #{discriminator_forward.1} parent=0
    _
  %s10 = ssub.s32 1, %s8
  %s11 = scalar_select 0, %s10, %s8
  %12 = sst [smem:[#allocation2]] %s6
  // Predicated region
  $region2: #{discriminator_forward.1} parent=0 // pred_check
    _
  $region3: #{discriminator_forward.1} parent=0 // pred_check_branch
    %14 = sbr.rel (0) target = $region5
  $region4: #{discriminator_forward.1} parent=0 // pred_region
    _
  $region5: #{discriminator_forward.1} parent=0 // pred_fallthru
    _
  // Predicated region
  $region6: #{discriminator_forward.1} parent=0 // pred_check
    _
  $region7: #{discriminator_forward.1} parent=0 // pred_check_branch
    %16 = sbr.rel (0) target = $region9
  $region8: #{discriminator_forward.1} parent=0 // pred_region
    _
  $region9: #{discriminator_forward.1} parent=0 // pred_fallthru
    _
  // Predicated region
  $region10: #{discriminator_forward.1} parent=0 // pred_check
    _
  $region11: #{discriminator_forward.1} parent=0 // pred_check_branch
    %18 = sbr.rel (0) target = $region13
  $region12: #{discriminator_forward.1} parent=0 // pred_region
    _
  $region13: #{discriminator_forward.1} parent=0 // pred_fallthru
    _
  // Predicated region
  $region14: #{discriminator_forward.1} parent=0 // pred_check
    _
  $region15: #{discriminator_forward.1} parent=0 // pred_check_branch
    %20 = sbr.rel (0) target = $region17
  $region16: #{discriminator_forward.1} parent=0 // pred_region
    _
  $region17: #{discriminator_forward.1} parent=0 // pred_fallthru
    _
  // Predicated region
  $region18: #{discriminator_forward.1} parent=0 // pred_check
    _
  $region19: #{discriminator_forward.1} parent=0 // pred_check_branch
    %22 = sbr.rel (0) target = $region21
  $region20: #{discriminator_forward.1} parent=0 // pred_region
    _
  $region21: #{discriminator_forward.1} parent=0 // pred_fallthru
    _
  // Predicated region
  $region22: #{discriminator_forward.1} parent=0 // pred_check
    _
  $region23: #{discriminator_forward.1} parent=0 // pred_check_branch
    %24 = sbr.rel (0) target = $region25
  $region24: #{discriminator_forward.1} parent=0 // pred_region
    _
  $region25: #{discriminator_forward.1} parent=0 // pred_fallthru
    _
  // Predicated region
  $region26: #{discriminator_forward.1} parent=0 // pred_check
    _
  $region27: #{discriminator_forward.1} parent=0 // pred_check_branch
    %26 = sbr.rel (0) target = $region29
  $region28: #{discriminator_forward.1} parent=0 // pred_region
    _
  $region29: #{discriminator_forward.1} parent=0 // pred_fallthru
    _
  %v28 = vld [vmem:[%s0] sm:$0xf]
  %v29 = vld [vmem:[%s0 + $0x4] sm:$0xf]
  %v30 = vld [vmem:[%s0 + $0x8] sm:$0xf]
  %v31 = vld [vmem:[%s0 + $0xc] sm:$0xf]
  %v32 = vld [vmem:[%s0 + $0x10] sm:$0xf]
  %v33 = vld [vmem:[%s0 + $0x14] sm:$0xf]
  %v34 = vld [vmem:[%s0 + $0x18] sm:$0xf]
  %v35 = vld [vmem:[%s0 + $0x1c] sm:$0xf]
  %v36 = vld [vmem:[%s0 + $0x20] sm:$0xf]
  %v37 = vld [vmem:[%s0 + $0x24] sm:$0xf]
  %v38 = vld [vmem:[%s0 + $0x28] sm:$0xf]
  %v39 = vld [vmem:[%s0 + $0x2c] sm:$0xf]
  %v40 = vld [vmem:[%s0 + $0x30] sm:$0xf]
  %v41 = vld [vmem:[%s0 + $0x34] sm:$0xf]
  %v42 = vld [vmem:[%s0 + $0x38] sm:$0xf]
  %v43 = vld [vmem:[%s0 + $0x3c] sm:$0xf]
  %v44 = vld [vmem:[%s1] sm:$0xf]
  %v45 = vld [vmem:[%s1 + $0x4] sm:$0xf]
  %v46 = vld [vmem:[%s2] sm:$0x1]
  %v48 = vperm.slane %v46, 0
  %v66 = vunpack.c.l.b16 %v28
  %v67 = vunpack.c.l.b16 %v29
  %v68 = vunpack.c.l.b16 %v30
  %v69 = vunpack.c.l.b16 %v31
  %v70 = vunpack.c.l.b16 %v32
  %v71 = vunpack.c.l.b16 %v33
  %v72 = vunpack.c.l.b16 %v34
  %v73 = vunpack.c.l.b16 %v35
  %v74 = vunpack.c.l.b16 %v36
  %v75 = vunpack.c.l.b16 %v37
  %v76 = vunpack.c.l.b16 %v38
  %v77 = vunpack.c.l.b16 %v39
  %v78 = vunpack.c.l.b16 %v40
  %v79 = vunpack.c.l.b16 %v41
  %v80 = vunpack.c.l.b16 %v42
  %v81 = vunpack.c.l.b16 %v43
  %v82 = vpack.c.b16 %v67, %v66
  %v83 = vpack.c.b16 %v69, %v68
  %v84 = vpack.c.b16 %v71, %v70
  %v85 = vpack.c.b16 %v73, %v72
  %v86 = vpack.c.b16 %v75, %v74
  %v87 = vpack.c.b16 %v77, %v76
  %v88 = vpack.c.b16 %v79, %v78
  %v89 = vpack.c.b16 %v81, %v80
  %v92 = vunpack.c.l.b16 %v44
  %v93 = vunpack.c.l.b16 %v45
  %v94 = vpack.c.b16 %v93, %v92
  %vm96 = vcmask 130048
  %v98 = vsel %vm96, %v82, 0
  %v101 = vsel %vm96, %v83, 0
  %v104 = vsel %vm96, %v84, 0
  %v107 = vsel %vm96, %v85, 0
  %v110 = vsel %vm96, %v86, 0
  %v113 = vsel %vm96, %v87, 0
  %v116 = vsel %vm96, %v88, 0
  %v119 = vsel %vm96, %v89, 0
  %121 = vmatpush.bf16.msra.mxu0 0
  %122 = vmatpush.bf16.msra.mxu0 0
  %123 = vmatpush.bf16.msra.mxu0 0
  %124 = vmatpush.bf16.msra.mxu0 0
  %125 = vmatpush.bf16.msra.mxu0 0
  %126 = vmatpush.bf16.msra.mxu0 0
  %127 = vmatpush.bf16.msra.mxu0 0
  %128 = vmatpush.bf16.msra.mxu0 %v94
  %129 = vmatmul.bf16.gmra.mxu0 %v98
  %v130 = vpop.f32.mrf.mxu0
  %v131 = vadd.f32 %v48, %v130
  %v132 = vpop.f32.mrf.mxu0
  %v133 = vadd.f32 %v48, %v132
  %134 = vmatmul.bf16.gmra.mxu0 %v101
  %v135 = vpop.f32.mrf.mxu0
  %v136 = vadd.f32 %v48, %v135
  %v137 = vpop.f32.mrf.mxu0
  %v138 = vadd.f32 %v48, %v137
  %139 = vmatmul.bf16.gmra.mxu0 %v104
  %v140 = vpop.f32.mrf.mxu0
  %v141 = vadd.f32 %v48, %v140
  %v142 = vpop.f32.mrf.mxu0
  %v143 = vadd.f32 %v48, %v142
  %144 = vmatmul.bf16.gmra.mxu0 %v107
  %v145 = vpop.f32.mrf.mxu0
  %v146 = vadd.f32 %v48, %v145
  %v147 = vpop.f32.mrf.mxu0
  %v148 = vadd.f32 %v48, %v147
  %149 = vmatmul.bf16.gmra.mxu0 %v110
  %v150 = vpop.f32.mrf.mxu0
  %v151 = vadd.f32 %v48, %v150
  %v152 = vpop.f32.mrf.mxu0
  %v153 = vadd.f32 %v48, %v152
  %154 = vmatmul.bf16.gmra.mxu0 %v113
  %v155 = vpop.f32.mrf.mxu0
  %v156 = vadd.f32 %v48, %v155
  %v157 = vpop.f32.mrf.mxu0
  %v158 = vadd.f32 %v48, %v157
  %159 = vmatmul.bf16.gmra.mxu0 %v116
  %v160 = vpop.f32.mrf.mxu0
  %v161 = vadd.f32 %v48, %v160
  %v162 = vpop.f32.mrf.mxu0
  %v163 = vadd.f32 %v48, %v162
  %164 = vmatmul.bf16.gmra.mxu0 %v119
  %v165 = vpop.f32.mrf.mxu0
  %v166 = vadd.f32 %v48, %v165
  %v167 = vpop.f32.mrf.mxu0
  %v168 = vadd.f32 %v48, %v167
  %169 = vdwg.mxu0
  %vm170 = vcmp.gt.f32.partialorder %v131, 0.0
  %vm171 = vcmp.gt.f32.partialorder %v133, 0.0
  %vm172 = vcmp.gt.f32.partialorder %v136, 0.0
  %vm173 = vcmp.gt.f32.partialorder %v138, 0.0
  %vm174 = vcmp.gt.f32.partialorder %v141, 0.0
  %vm175 = vcmp.gt.f32.partialorder %v143, 0.0
  %vm176 = vcmp.gt.f32.partialorder %v146, 0.0
  %vm177 = vcmp.gt.f32.partialorder %v148, 0.0
  %vm178 = vcmp.gt.f32.partialorder %v151, 0.0
  %vm179 = vcmp.gt.f32.partialorder %v153, 0.0
  %vm180 = vcmp.gt.f32.partialorder %v156, 0.0
  %vm181 = vcmp.gt.f32.partialorder %v158, 0.0
  %vm182 = vcmp.gt.f32.partialorder %v161, 0.0
  %vm183 = vcmp.gt.f32.partialorder %v163, 0.0
  %vm184 = vcmp.gt.f32.partialorder %v166, 0.0
  %vm185 = vcmp.gt.f32.partialorder %v168, 0.0
  %v186 = vmul.f32 %v131, 0.2
  %v187 = vmul.f32 %v133, 0.2
  %v188 = vmul.f32 %v136, 0.2
  %v189 = vmul.f32 %v138, 0.2
  %v190 = vmul.f32 %v141, 0.2
  %v191 = vmul.f32 %v143, 0.2
  %v192 = vmul.f32 %v146, 0.2
  %v193 = vmul.f32 %v148, 0.2
  %v194 = vmul.f32 %v151, 0.2
  %v195 = vmul.f32 %v153, 0.2
  %v196 = vmul.f32 %v156, 0.2
  %v197 = vmul.f32 %v158, 0.2
  %v198 = vmul.f32 %v161, 0.2
  %v199 = vmul.f32 %v163, 0.2
  %v200 = vmul.f32 %v166, 0.2
  %v201 = vmul.f32 %v168, 0.2
  %v202 = vsel %vm170, %v131, %v186
  %v203 = vsel %vm171, %v133, %v187
  %v204 = vsel %vm172, %v136, %v188
  %v205 = vsel %vm173, %v138, %v189
  %v206 = vsel %vm174, %v141, %v190
  %v207 = vsel %vm175, %v143, %v191
  %v208 = vsel %vm176, %v146, %v192
  %v209 = vsel %vm177, %v148, %v193
  %v210 = vsel %vm178, %v151, %v194
  %v211 = vsel %vm179, %v153, %v195
  %v212 = vsel %vm180, %v156, %v196
  %v213 = vsel %vm181, %v158, %v197
  %v214 = vsel %vm182, %v161, %v198
  %v215 = vsel %vm183, %v163, %v199
  %v216 = vsel %vm184, %v166, %v200
  %v217 = vsel %vm185, %v168, %v201
  %v218 = vpack.c.bf16 %v203, %v202
  %v219 = vpack.c.bf16 %v205, %v204
  %v220 = vpack.c.bf16 %v207, %v206
  %v221 = vpack.c.bf16 %v209, %v208
  %v222 = vpack.c.bf16 %v211, %v210
  %v223 = vpack.c.bf16 %v213, %v212
  %v224 = vpack.c.bf16 %v215, %v214
  %v225 = vpack.c.bf16 %v217, %v216
  %v226 = vld [vmem:[%s3] sm:$0xf]
  %v227 = vld [vmem:[%s3 + $0x4] sm:$0xf]
  %v228 = vld [vmem:[%s3 + $0x8] sm:$0xf]
  %v229 = vld [vmem:[%s3 + $0xc] sm:$0xf]
  %v230 = vld [vmem:[%s3 + $0x10] sm:$0xf]
  %v231 = vld [vmem:[%s3 + $0x14] sm:$0xf]
  %v232 = vld [vmem:[%s3 + $0x18] sm:$0xf]
  %v233 = vld [vmem:[%s3 + $0x1c] sm:$0xf]
  %v234 = vld [vmem:[%s3 + $0x20] sm:$0xf]
  %v235 = vld [vmem:[%s3 + $0x24] sm:$0xf]
  %v236 = vld [vmem:[%s3 + $0x28] sm:$0xf]
  %v237 = vld [vmem:[%s3 + $0x2c] sm:$0xf]
  %v238 = vld [vmem:[%s3 + $0x30] sm:$0xf]
  %v239 = vld [vmem:[%s3 + $0x34] sm:$0xf]
  %v240 = vld [vmem:[%s3 + $0x38] sm:$0xf]
  %v241 = vld [vmem:[%s3 + $0x3c] sm:$0xf]
  %v242 = vld [vmem:[%s4] sm:$0x1]
  %v244 = vperm.slane %v242, 0
  %v262 = vunpack.c.l.b16 %v226
  %v263 = vunpack.c.l.b16 %v227
  %v264 = vunpack.c.l.b16 %v228
  %v265 = vunpack.c.l.b16 %v229
  %v266 = vunpack.c.l.b16 %v230
  %v267 = vunpack.c.l.b16 %v231
  %v268 = vunpack.c.l.b16 %v232
  %v269 = vunpack.c.l.b16 %v233
  %v270 = vunpack.c.l.b16 %v234
  %v271 = vunpack.c.l.b16 %v235
  %v272 = vunpack.c.l.b16 %v236
  %v273 = vunpack.c.l.b16 %v237
  %v274 = vunpack.c.l.b16 %v238
  %v275 = vunpack.c.l.b16 %v239
  %v276 = vunpack.c.l.b16 %v240
  %v277 = vunpack.c.l.b16 %v241
  %v278 = vpack.c.b16 %v263, %v262
  %v279 = vpack.c.b16 %v265, %v264
  %v280 = vpack.c.b16 %v267, %v266
  %v281 = vpack.c.b16 %v269, %v268
  %v282 = vpack.c.b16 %v271, %v270
  %v283 = vpack.c.b16 %v273, %v272
  %v284 = vpack.c.b16 %v275, %v274
  %v285 = vpack.c.b16 %v277, %v276
  %294 = vmatpush.bf16.msra.mxu0 %v285
  %295 = vmatpush.bf16.msra.mxu0 %v284
  %296 = vmatpush.bf16.msra.mxu0 %v283
  %297 = vmatpush.bf16.msra.mxu0 %v282
  %298 = vmatpush.bf16.msra.mxu0 %v281
  %299 = vmatpush.bf16.msra.mxu0 %v280
  %300 = vmatpush.bf16.msra.mxu0 %v279
  %301 = vmatpush.bf16.msra.mxu0 %v278
  %302 = vmatmul.bf16.gmra.mxu0 %v218
  %v303 = vpop.f32.mrf.mxu0
  %v304 = vadd.f32 %v244, %v303
  %v305 = vpop.f32.mrf.mxu0
  %v306 = vadd.f32 %v244, %v305
  %307 = vmatmul.bf16.gmra.mxu0 %v219
  %v308 = vpop.f32.mrf.mxu0
  %v309 = vadd.f32 %v244, %v308
  %v310 = vpop.f32.mrf.mxu0
  %v311 = vadd.f32 %v244, %v310
  %312 = vmatmul.bf16.gmra.mxu0 %v220
  %v313 = vpop.f32.mrf.mxu0
  %v314 = vadd.f32 %v244, %v313
  %v315 = vpop.f32.mrf.mxu0
  %v316 = vadd.f32 %v244, %v315
  %317 = vmatmul.bf16.gmra.mxu0 %v221
  %v318 = vpop.f32.mrf.mxu0
  %v319 = vadd.f32 %v244, %v318
  %v320 = vpop.f32.mrf.mxu0
  %v321 = vadd.f32 %v244, %v320
  %322 = vmatmul.bf16.gmra.mxu0 %v222
  %v323 = vpop.f32.mrf.mxu0
  %v324 = vadd.f32 %v244, %v323
  %v325 = vpop.f32.mrf.mxu0
  %v326 = vadd.f32 %v244, %v325
  %327 = vmatmul.bf16.gmra.mxu0 %v223
  %v328 = vpop.f32.mrf.mxu0
  %v329 = vadd.f32 %v244, %v328
  %v330 = vpop.f32.mrf.mxu0
  %v331 = vadd.f32 %v244, %v330
  %332 = vmatmul.bf16.gmra.mxu0 %v224
  %v333 = vpop.f32.mrf.mxu0
  %v334 = vadd.f32 %v244, %v333
  %v335 = vpop.f32.mrf.mxu0
  %v336 = vadd.f32 %v244, %v335
  %337 = vmatmul.bf16.gmra.mxu0 %v225
  %v338 = vpop.f32.mrf.mxu0
  %v339 = vadd.f32 %v244, %v338
  %v340 = vpop.f32.mrf.mxu0
  %v341 = vadd.f32 %v244, %v340
  %342 = vdwg.mxu0
  %vm343 = vcmp.gt.f32.partialorder %v304, 0.0
  %vm344 = vcmp.gt.f32.partialorder %v306, 0.0
  %vm345 = vcmp.gt.f32.partialorder %v309, 0.0
  %vm346 = vcmp.gt.f32.partialorder %v311, 0.0
  %vm347 = vcmp.gt.f32.partialorder %v314, 0.0
  %vm348 = vcmp.gt.f32.partialorder %v316, 0.0
  %vm349 = vcmp.gt.f32.partialorder %v319, 0.0
  %vm350 = vcmp.gt.f32.partialorder %v321, 0.0
  %vm351 = vcmp.gt.f32.partialorder %v324, 0.0
  %vm352 = vcmp.gt.f32.partialorder %v326, 0.0
  %vm353 = vcmp.gt.f32.partialorder %v329, 0.0
  %vm354 = vcmp.gt.f32.partialorder %v331, 0.0
  %vm355 = vcmp.gt.f32.partialorder %v334, 0.0
  %vm356 = vcmp.gt.f32.partialorder %v336, 0.0
  %vm357 = vcmp.gt.f32.partialorder %v339, 0.0
  %vm358 = vcmp.gt.f32.partialorder %v341, 0.0
  %v359 = vmul.f32 %v304, 0.2
  %v360 = vmul.f32 %v306, 0.2
  %v361 = vmul.f32 %v309, 0.2
  %v362 = vmul.f32 %v311, 0.2
  %v363 = vmul.f32 %v314, 0.2
  %v364 = vmul.f32 %v316, 0.2
  %v365 = vmul.f32 %v319, 0.2
  %v366 = vmul.f32 %v321, 0.2
  %v367 = vmul.f32 %v324, 0.2
  %v368 = vmul.f32 %v326, 0.2
  %v369 = vmul.f32 %v329, 0.2
  %v370 = vmul.f32 %v331, 0.2
  %v371 = vmul.f32 %v334, 0.2
  %v372 = vmul.f32 %v336, 0.2
  %v373 = vmul.f32 %v339, 0.2
  %v374 = vmul.f32 %v341, 0.2
  %v375 = vsel %vm343, %v304, %v359
  %v376 = vsel %vm344, %v306, %v360
  %v377 = vsel %vm345, %v309, %v361
  %v378 = vsel %vm346, %v311, %v362
  %v379 = vsel %vm347, %v314, %v363
  %v380 = vsel %vm348, %v316, %v364
  %v381 = vsel %vm349, %v319, %v365
  %v382 = vsel %vm350, %v321, %v366
  %v383 = vsel %vm351, %v324, %v367
  %v384 = vsel %vm352, %v326, %v368
  %v385 = vsel %vm353, %v329, %v369
  %v386 = vsel %vm354, %v331, %v370
  %v387 = vsel %vm355, %v334, %v371
  %v388 = vsel %vm356, %v336, %v372
  %v389 = vsel %vm357, %v339, %v373
  %v390 = vsel %vm358, %v341, %v374
  %v391 = vld [vmem:[%s5] sm:$0xf]
  %v392 = vpack.c.bf16 %v376, %v375
  %v393 = vpack.c.bf16 %v378, %v377
  %v394 = vpack.c.bf16 %v380, %v379
  %v395 = vpack.c.bf16 %v382, %v381
  %v396 = vpack.c.bf16 %v384, %v383
  %v397 = vpack.c.bf16 %v386, %v385
  %v398 = vpack.c.bf16 %v388, %v387
  %v399 = vpack.c.bf16 %v390, %v389
  %s400 = sld [smem:[#allocation2]]
  %v401 = vstv %s400
  %402 = vmatpush.bf16.xpose.msra.mxu0 %v399
  %403 = vmatpush.bf16.xpose.msra.mxu0 %v398
  %404 = vmatpush.bf16.xpose.msra.mxu0 %v397
  %405 = vmatpush.bf16.xpose.msra.mxu0 %v396
  %406 = vmatpush.bf16.xpose.msra.mxu0 %v395
  %407 = vmatpush.bf16.xpose.msra.mxu0 %v394
  %408 = vmatpush.bf16.xpose.msra.mxu0 %v393
  %409 = vmatpush.bf16.xpose.msra.mxu0 %v392
  %410 = vmatmul.bf16.gmra.mxu0 %v391
  %v411 = vpop.f32.mrf.mxu0
  %v412 = vadd.f32 %v401, %v411
  %v413 = vpop.f32.mrf.mxu0
  %414 = vdwg.mxu0
  %v415 = vpack.c.bf16 %v412, %v412
  %416 = vst [vmem:[%s7] sm:$0xf] %v415
  // Predicated region
  $region30: #{discriminator_forward.1} parent=0 // pred_check
    _
  $region31: #{discriminator_forward.1} parent=0 // pred_check_branch
    %418 = sbr.rel (0) target = $region33
  $region32: #{discriminator_forward.1} parent=0 // pred_region
    _
  $region33: #{discriminator_forward.1} parent=0 // pred_fallthru
    _
  // Predicated region
  $region34: #{discriminator_forward.1} parent=0 // pred_check
    _
  $region35: #{discriminator_forward.1} parent=0 // pred_check_branch
    %420 = sbr.rel (0) target = $region37
  $region36: #{discriminator_forward.1} parent=0 // pred_region
    _
  $region37: #{discriminator_forward.1} parent=0 // pred_fallthru
    _

</llo_original>
